<compile_context>
chip_gen: v6e
topology: v6e:2x2x1
jax: 0.10.0
libtpu: 0.0.40
codegen_flags: <defaults>
</compile_context>

<pallas_src>
import functools

import jax
import jax.numpy as jnp
from jax import lax
from jax.experimental import pallas as pl
from jax.experimental.pallas import tpu as pltpu


def _sepconv_kernel(x_ref, coeff_ref, pw_ref, pb_ref, o_ref,
                    *, H, W, Cin, Cout, NB):
    HW = H * W
    f32 = jnp.float32

    x2 = x_ref[0].astype(f32)       # (NB*Cin, HW): batch packed on sublanes
    pw = pw_ref[0].astype(f32)      # (Cout, Cin)  pointwise weights
    pb = pb_ref[0].astype(f32)      # (Cout, 1)    pointwise bias (dw bias folded in)

    # ---- depthwise 3x3 "same" ---------------------------------------------
    # Tap t (flat shift s): value = roll(x, -s).  The border mask is already
    # fused into coeff_ref[t] (zero where the tap is out of image, which also
    # kills roll wrap-around), so each tap is one XLU roll + one VPU FMA over
    # the whole sublane-packed block.
    acc = jnp.zeros((NB * Cin, HW), f32)
    for dy in range(3):
        for dx in range(3):
            t = dy * 3 + dx
            s = (dy - 1) * W + (dx - 1)
            tap = x2 if s == 0 else pltpu.roll(x2, (-s) % HW, axis=1)
            acc = acc + tap * coeff_ref[t].astype(f32)

    # ---- pointwise 1x1 + bias + ReLU (VPU; far too small for the MXU) ------
    # Lane broadcasts of pw columns / bias hoisted out of the per-image loop
    # (JAX does not CSE broadcast_in_dim across the unrolled loop).
    pw_planes = [jnp.broadcast_to(pw[:, ci:ci + 1], (Cout, HW)) for ci in range(Cin)]
    pb_plane = jnp.broadcast_to(pb, (Cout, HW))
    for b in range(NB):
        out_b = pb_plane
        for ci in range(Cin):
            r = b * Cin + ci
            out_b = out_b + acc[r:r + 1, :] * pw_planes[ci]
        o_ref[0, b * Cout:(b + 1) * Cout, :] = (
            jnp.maximum(out_b, 0.0).astype(o_ref.dtype))


def _num_tensorcores():
    """Best-effort TensorCores-per-chip query (v5e/v6e: 1, v7x: 2)."""
    try:
        info = pltpu.get_tpu_info()
        for attr in ("num_tensorcores", "tensorcores_per_chip", "num_cores",
                     "cores_per_chip", "num_cores_per_chip"):
            v = getattr(info, attr, None)
            if isinstance(v, int) and v > 0:
                return v
    except Exception:
        pass
    try:
        kind = jax.devices()[0].device_kind.lower().replace(" ", "")
        if "v7" in kind or "tpu7" in kind:
            return 2
    except Exception:
        pass
    return 1


def _pick_batch_block(N, per_img_bytes, num_tc,
                      budget_bytes=8 << 20, max_nb=16):
    """Images per grid step: one step per TensorCore (single-TC chips collapse
    to one big step; v7x keeps 2 parallel steps), capped by a generous VMEM
    budget (per-image footprint here is ~12 KiB) and a modest unroll cap."""
    if N <= 0:
        return 1
    nb = -(-N // max(1, num_tc))                       # ceil(N / num_tc)
    nb = min(nb, max_nb, max(1, budget_bytes // max(per_img_bytes, 1)))
    return max(1, int(nb))


def seperable_conv(x_nchw, dw_w, dw_b, pw_w, pw_b, *, batch_block=None):
    """x_nchw: (N, Cin, H, W); dw_w: (3,3,Cin); dw_b: (Cin,);
    pw_w: (Cin, Cout); pw_b: (Cout,). Returns (N, Cout, H, W)."""
    N, Cin, H, W = x_nchw.shape
    Cout = pw_w.shape[1]
    HW = H * W
    f32 = jnp.float32

    itemsize = jnp.dtype(x_nchw.dtype).itemsize
    per_img = (Cin + Cout) * HW * itemsize
    NB = batch_block or _pick_batch_block(N, per_img, _num_tensorcores())
    NB = max(1, min(NB, N))
    n_grid = -(-N // NB)
    N_pad = n_grid * NB

    # (N, Cin, H, W) -> (n_grid, NB*Cin, HW): free reshapes; only a ragged
    # batch tail is zero-padded (extra images discarded after the kernel).
    x_flat = x_nchw.reshape(N, Cin, HW)
    if N_pad != N:
        x_flat = jnp.pad(x_flat, ((0, N_pad - N), (0, 0), (0, 0)))
    x_blk = x_flat.reshape(n_grid, NB * Cin, HW)

    # Per-tap coefficient planes with the border mask fused in, pre-tiled
    # across the NB sublane-packed images: coeff[t, r, p] = tap-t weight of
    # row r's channel if tap t of pixel p is inside the image, else 0.
    dw_c9 = jnp.transpose(dw_w.reshape(9, Cin), (1, 0)).astype(f32)     # (Cin, 9)
    dw_tiled = jnp.tile(dw_c9, (NB, 1))                                 # (NB*Cin, 9)
    pos = jnp.arange(HW, dtype=jnp.int32)
    py, px = pos // W, pos % W
    planes = []
    for dy in range(3):
        for dx in range(3):
            oy, ox = dy - 1, dx - 1
            valid = jnp.ones((HW,), dtype=bool)
            if oy < 0:
                valid &= py >= -oy
            if oy > 0:
                valid &= py < H - oy
            if ox < 0:
                valid &= px >= -ox
            if ox > 0:
                valid &= px < W - ox
            t = dy * 3 + dx
            planes.append(jnp.where(valid[None, :], dw_tiled[:, t:t + 1], 0.0))
    coeff = jnp.stack(planes, axis=0)                                   # (9, NB*Cin, HW)

    # Fold the depthwise bias through the (linear) 1x1 into its bias:
    # pb_eff = dw_b @ pw_w + pw_b  (exact: ReLU comes after the bias).
    pw_k = jnp.transpose(pw_w, (1, 0)).astype(f32)[None]                # (1, Cout, Cin)
    pb_eff = (jnp.dot(dw_b.astype(f32), pw_w.astype(f32))
              + pw_b.astype(f32)).reshape(1, Cout, 1)                   # (1, Cout, 1)

    kernel = functools.partial(_sepconv_kernel,
                               H=H, W=W, Cin=Cin, Cout=Cout, NB=NB)

    out = pl.pallas_call(
        kernel,
        out_shape=jax.ShapeDtypeStruct((n_grid, NB * Cout, HW), x_nchw.dtype),
        grid_spec=pltpu.PrefetchScalarGridSpec(
            num_scalar_prefetch=0,
            grid=(n_grid,),
            in_specs=[
                pl.BlockSpec((1, NB * Cin, HW), lambda n: (n, 0, 0)),
                pl.BlockSpec((9, NB * Cin, HW), lambda n: (0, 0, 0)),
                pl.BlockSpec((1, Cout, Cin), lambda n: (0, 0, 0)),
                pl.BlockSpec((1, Cout, 1), lambda n: (0, 0, 0)),
            ],
            out_specs=pl.BlockSpec((1, NB * Cout, HW), lambda n: (n, 0, 0)),
        ),
        compiler_params=pltpu.CompilerParams(
            dimension_semantics=("parallel",)),
    )(x_blk, coeff, pw_k, pb_eff)

    out = out.reshape(N_pad, Cout, HW)[:N]
    return out.reshape(N, Cout, H, W)            # free reshape, channel-major


def _reference(x_nchw, dw_w, dw_b, pw_w, pw_b):
    """Pure-JAX reference matching PyTorch semantics (NCHW)."""
    Cin = x_nchw.shape[1]
    Cout = pw_w.shape[1]
    w_dw = jnp.transpose(dw_w, (2, 0, 1))[:, None, :, :]      # (Cin,1,3,3)
    y = lax.conv_general_dilated(
        x_nchw, w_dw, window_strides=(1, 1), padding=((1, 1), (1, 1)),
        dimension_numbers=("NCHW", "OIHW", "NCHW"), feature_group_count=Cin)
    y = y + dw_b.reshape(1, Cin, 1, 1)
    w_pw = jnp.transpose(pw_w, (1, 0))[:, :, None, None]      # (Cout,Cin,1,1)
    z = lax.conv_general_dilated(
        y, w_pw, window_strides=(1, 1), padding=((0, 0), (0, 0)),
        dimension_numbers=("NCHW", "OIHW", "NCHW"))
    z = z + pw_b.reshape(1, Cout, 1, 1)
    return jnp.maximum(z, 0.0)


if __name__ == "__main__":
    N, Cin, H, W = 2, 4, 16, 16
    Cout = 8

    key = jax.random.PRNGKey(0)
    kx, k1, k2, k3, k4 = jax.random.split(key, 5)

    x = jax.random.normal(kx, (N, Cin, H, W), dtype=jnp.float32)
    dw_w = 0.1 * jax.random.normal(k1, (3, 3, Cin), dtype=jnp.float32)  # depthwise 3x3
    dw_b = 0.1 * jax.random.normal(k2, (Cin,), dtype=jnp.float32)
    pw_w = 0.1 * jax.random.normal(k3, (Cin, Cout), dtype=jnp.float32)  # pointwise 1x1
    pw_b = 0.1 * jax.random.normal(k4, (Cout,), dtype=jnp.float32)

    out = seperable_conv(x, dw_w, dw_b, pw_w, pw_b)
    out = jax.block_until_ready(out)

    ref = _reference(x, dw_w, dw_b, pw_w, pw_b)
    assert out.shape == (N, Cout, H, W)
    assert jnp.allclose(out, ref, atol=1e-4, rtol=1e-4)

    print("KERNEL_OK")
</pallas_src>

<mosaic_0001>
module attributes {stable_mosaic.version = 11 : i64} {
  func.func @_sepconv_kernel(%arg0: i32, %arg1: memref<1x8x256xf32, #tpu.memory_space<vmem>>, %arg2: memref<9x8x256xf32, #tpu.memory_space<vmem>>, %arg3: memref<1x8x4xf32, #tpu.memory_space<vmem>>, %arg4: memref<1x8x1xf32, #tpu.memory_space<vmem>>, %arg5: memref<1x16x256xf32, #tpu.memory_space<vmem>>) attributes {dimension_semantics = [#tpu.dimension_semantics<parallel>], iteration_bounds = array<i64: 1>, scalar_prefetch = 0 : i64, scratch_operands = 0 : i64, tpu.core_type = #tpu.core_type<tc>, window_params = [{transform_indices = @transform_0, window_bounds = array<i64: 1, 8, 256>}, {pipeline_mode = #tpu.pipeline_mode<synchronous>, transform_indices = @transform_1, window_bounds = array<i64: 9, 8, 256>}, {pipeline_mode = #tpu.pipeline_mode<synchronous>, transform_indices = @transform_2, window_bounds = array<i64: 1, 8, 4>}, {pipeline_mode = #tpu.pipeline_mode<synchronous>, transform_indices = @transform_3, window_bounds = array<i64: 1, 8, 1>}, {transform_indices = @transform_4, window_bounds = array<i64: 1, 16, 256>}]} {
    %c0 = arith.constant 0 : index
    %c0_0 = arith.constant 0 : index
    %c0_1 = arith.constant 0 : index
    %0 = vector.load %arg1[%c0, %c0_0, %c0_1] : memref<1x8x256xf32, #tpu.memory_space<vmem>>, vector<1x8x256xf32>
    %1 = vector.shape_cast %0 : vector<1x8x256xf32> to vector<8x256xf32>
    %c0_2 = arith.constant 0 : index
    %c0_3 = arith.constant 0 : index
    %c0_4 = arith.constant 0 : index
    %2 = vector.load %arg3[%c0_2, %c0_3, %c0_4] : memref<1x8x4xf32, #tpu.memory_space<vmem>>, vector<1x8x4xf32>
    %3 = vector.shape_cast %2 : vector<1x8x4xf32> to vector<8x4xf32>
    %c0_5 = arith.constant 0 : index
    %c0_6 = arith.constant 0 : index
    %c0_7 = arith.constant 0 : index
    %4 = vector.load %arg4[%c0_5, %c0_6, %c0_7] : memref<1x8x1xf32, #tpu.memory_space<vmem>>, vector<1x8x1xf32>
    %5 = vector.shape_cast %4 : vector<1x8x1xf32> to vector<8x1xf32>
    %cst = arith.constant 0.000000e+00 : f32
    %6 = vector.broadcast %cst : f32 to vector<8x256xf32>
    %c17_i32 = arith.constant 17 : i32
    %7 = tpu.dynamic_rotate %1 by %c17_i32 dim 1 : vector<8x256xf32>, i32 -> vector<8x256xf32>
    %c0_8 = arith.constant 0 : index
    %c0_9 = arith.constant 0 : index
    %c0_10 = arith.constant 0 : index
    %8 = vector.load %arg2[%c0_8, %c0_9, %c0_10] : memref<9x8x256xf32, #tpu.memory_space<vmem>>, vector<1x8x256xf32>
    %9 = vector.shape_cast %8 : vector<1x8x256xf32> to vector<8x256xf32>
    %10 = arith.mulf %7, %9 : vector<8x256xf32>
    %11 = arith.addf %6, %10 : vector<8x256xf32>
    %c16_i32 = arith.constant 16 : i32
    %12 = tpu.dynamic_rotate %1 by %c16_i32 dim 1 : vector<8x256xf32>, i32 -> vector<8x256xf32>
    %c1 = arith.constant 1 : index
    %c0_11 = arith.constant 0 : index
    %c0_12 = arith.constant 0 : index
    %13 = vector.load %arg2[%c1, %c0_11, %c0_12] : memref<9x8x256xf32, #tpu.memory_space<vmem>>, vector<1x8x256xf32>
    %14 = vector.shape_cast %13 : vector<1x8x256xf32> to vector<8x256xf32>
    %15 = arith.mulf %12, %14 : vector<8x256xf32>
    %16 = arith.addf %11, %15 : vector<8x256xf32>
    %c15_i32 = arith.constant 15 : i32
    %17 = tpu.dynamic_rotate %1 by %c15_i32 dim 1 : vector<8x256xf32>, i32 -> vector<8x256xf32>
    %c2 = arith.constant 2 : index
    %c0_13 = arith.constant 0 : index
    %c0_14 = arith.constant 0 : index
    %18 = vector.load %arg2[%c2, %c0_13, %c0_14] : memref<9x8x256xf32, #tpu.memory_space<vmem>>, vector<1x8x256xf32>
    %19 = vector.shape_cast %18 : vector<1x8x256xf32> to vector<8x256xf32>
    %20 = arith.mulf %17, %19 : vector<8x256xf32>
    %21 = arith.addf %16, %20 : vector<8x256xf32>
    %c1_i32 = arith.constant 1 : i32
    %22 = tpu.dynamic_rotate %1 by %c1_i32 dim 1 : vector<8x256xf32>, i32 -> vector<8x256xf32>
    %c3 = arith.constant 3 : index
    %c0_15 = arith.constant 0 : index
    %c0_16 = arith.constant 0 : index
    %23 = vector.load %arg2[%c3, %c0_15, %c0_16] : memref<9x8x256xf32, #tpu.memory_space<vmem>>, vector<1x8x256xf32>
    %24 = vector.shape_cast %23 : vector<1x8x256xf32> to vector<8x256xf32>
    %25 = arith.mulf %22, %24 : vector<8x256xf32>
    %26 = arith.addf %21, %25 : vector<8x256xf32>
    %c4 = arith.constant 4 : index
    %c0_17 = arith.constant 0 : index
    %c0_18 = arith.constant 0 : index
    %27 = vector.load %arg2[%c4, %c0_17, %c0_18] : memref<9x8x256xf32, #tpu.memory_space<vmem>>, vector<1x8x256xf32>
    %28 = vector.shape_cast %27 : vector<1x8x256xf32> to vector<8x256xf32>
    %29 = arith.mulf %1, %28 : vector<8x256xf32>
    %30 = arith.addf %26, %29 : vector<8x256xf32>
    %c255_i32 = arith.constant 255 : i32
    %31 = tpu.dynamic_rotate %1 by %c255_i32 dim 1 : vector<8x256xf32>, i32 -> vector<8x256xf32>
    %c5 = arith.constant 5 : index
    %c0_19 = arith.constant 0 : index
    %c0_20 = arith.constant 0 : index
    %32 = vector.load %arg2[%c5, %c0_19, %c0_20] : memref<9x8x256xf32, #tpu.memory_space<vmem>>, vector<1x8x256xf32>
    %33 = vector.shape_cast %32 : vector<1x8x256xf32> to vector<8x256xf32>
    %34 = arith.mulf %31, %33 : vector<8x256xf32>
    %35 = arith.addf %30, %34 : vector<8x256xf32>
    %c241_i32 = arith.constant 241 : i32
    %36 = tpu.dynamic_rotate %1 by %c241_i32 dim 1 : vector<8x256xf32>, i32 -> vector<8x256xf32>
    %c6 = arith.constant 6 : index
    %c0_21 = arith.constant 0 : index
    %c0_22 = arith.constant 0 : index
    %37 = vector.load %arg2[%c6, %c0_21, %c0_22] : memref<9x8x256xf32, #tpu.memory_space<vmem>>, vector<1x8x256xf32>
    %38 = vector.shape_cast %37 : vector<1x8x256xf32> to vector<8x256xf32>
    %39 = arith.mulf %36, %38 : vector<8x256xf32>
    %40 = arith.addf %35, %39 : vector<8x256xf32>
    %c240_i32 = arith.constant 240 : i32
    %41 = tpu.dynamic_rotate %1 by %c240_i32 dim 1 : vector<8x256xf32>, i32 -> vector<8x256xf32>
    %c7 = arith.constant 7 : index
    %c0_23 = arith.constant 0 : index
    %c0_24 = arith.constant 0 : index
    %42 = vector.load %arg2[%c7, %c0_23, %c0_24] : memref<9x8x256xf32, #tpu.memory_space<vmem>>, vector<1x8x256xf32>
    %43 = vector.shape_cast %42 : vector<1x8x256xf32> to vector<8x256xf32>
    %44 = arith.mulf %41, %43 : vector<8x256xf32>
    %45 = arith.addf %40, %44 : vector<8x256xf32>
    %c239_i32 = arith.constant 239 : i32
    %46 = tpu.dynamic_rotate %1 by %c239_i32 dim 1 : vector<8x256xf32>, i32 -> vector<8x256xf32>
    %c8 = arith.constant 8 : index
    %c0_25 = arith.constant 0 : index
    %c0_26 = arith.constant 0 : index
    %47 = vector.load %arg2[%c8, %c0_25, %c0_26] : memref<9x8x256xf32, #tpu.memory_space<vmem>>, vector<1x8x256xf32>
    %48 = vector.shape_cast %47 : vector<1x8x256xf32> to vector<8x256xf32>
    %49 = arith.mulf %46, %48 : vector<8x256xf32>
    %50 = arith.addf %45, %49 : vector<8x256xf32>
    %51 = vector.extract_strided_slice %3 {offsets = [0, 0], sizes = [8, 1], strides = [1, 1]} : vector<8x4xf32> to vector<8x1xf32>
    %52 = vector.shape_cast %51 : vector<8x1xf32> to vector<8x1xf32>
    %53 = vector.broadcast %52 : vector<8x1xf32> to vector<8x256xf32>
    %54 = vector.extract_strided_slice %3 {offsets = [0, 1], sizes = [8, 1], strides = [1, 1]} : vector<8x4xf32> to vector<8x1xf32>
    %55 = vector.shape_cast %54 : vector<8x1xf32> to vector<8x1xf32>
    %56 = vector.broadcast %55 : vector<8x1xf32> to vector<8x256xf32>
    %57 = vector.extract_strided_slice %3 {offsets = [0, 2], sizes = [8, 1], strides = [1, 1]} : vector<8x4xf32> to vector<8x1xf32>
    %58 = vector.shape_cast %57 : vector<8x1xf32> to vector<8x1xf32>
    %59 = vector.broadcast %58 : vector<8x1xf32> to vector<8x256xf32>
    %60 = vector.extract_strided_slice %3 {offsets = [0, 3], sizes = [8, 1], strides = [1, 1]} : vector<8x4xf32> to vector<8x1xf32>
    %61 = vector.shape_cast %60 : vector<8x1xf32> to vector<8x1xf32>
    %62 = vector.broadcast %61 : vector<8x1xf32> to vector<8x256xf32>
    %63 = vector.shape_cast %5 : vector<8x1xf32> to vector<8x1xf32>
    %64 = vector.broadcast %63 : vector<8x1xf32> to vector<8x256xf32>
    %65 = vector.extract_strided_slice %50 {offsets = [0, 0], sizes = [1, 256], strides = [1, 1]} : vector<8x256xf32> to vector<1x256xf32>
    %66 = vector.broadcast %65 : vector<1x256xf32> to vector<8x256xf32>
    %67 = arith.mulf %66, %53 : vector<8x256xf32>
    %68 = arith.addf %64, %67 : vector<8x256xf32>
    %69 = vector.extract_strided_slice %50 {offsets = [1, 0], sizes = [1, 256], strides = [1, 1]} : vector<8x256xf32> to vector<1x256xf32>
    %70 = vector.broadcast %69 : vector<1x256xf32> to vector<8x256xf32>
    %71 = arith.mulf %70, %56 : vector<8x256xf32>
    %72 = arith.addf %68, %71 : vector<8x256xf32>
    %73 = vector.extract_strided_slice %50 {offsets = [2, 0], sizes = [1, 256], strides = [1, 1]} : vector<8x256xf32> to vector<1x256xf32>
    %74 = vector.broadcast %73 : vector<1x256xf32> to vector<8x256xf32>
    %75 = arith.mulf %74, %59 : vector<8x256xf32>
    %76 = arith.addf %72, %75 : vector<8x256xf32>
    %77 = vector.extract_strided_slice %50 {offsets = [3, 0], sizes = [1, 256], strides = [1, 1]} : vector<8x256xf32> to vector<1x256xf32>
    %78 = vector.broadcast %77 : vector<1x256xf32> to vector<8x256xf32>
    %79 = arith.mulf %78, %62 : vector<8x256xf32>
    %80 = arith.addf %76, %79 : vector<8x256xf32>
    %cst_27 = arith.constant 0.000000e+00 : f32
    %81 = vector.broadcast %cst_27 : f32 to vector<8x256xf32>
    %82 = arith.maximumf %80, %81 : vector<8x256xf32>
    %c0_28 = arith.constant 0 : index
    %c0_29 = arith.constant 0 : index
    %c0_30 = arith.constant 0 : index
    %83 = vector.load %arg5[%c0_28, %c0_29, %c0_30] : memref<1x16x256xf32, #tpu.memory_space<vmem>>, vector<1x8x256xf32>
    %84 = vector.shape_cast %83 : vector<1x8x256xf32> to vector<8x256xf32>
    %85 = vector.shape_cast %82 : vector<8x256xf32> to vector<1x8x256xf32>
    tpu.vector_store %arg5[%c0_28, %c0_29, %c0_30], %85 {strides = array<i32>} : memref<1x16x256xf32, #tpu.memory_space<vmem>>, vector<1x8x256xf32>,
    %86 = vector.extract_strided_slice %50 {offsets = [4, 0], sizes = [1, 256], strides = [1, 1]} : vector<8x256xf32> to vector<1x256xf32>
    %87 = vector.broadcast %86 : vector<1x256xf32> to vector<8x256xf32>
    %88 = arith.mulf %87, %53 : vector<8x256xf32>
    %89 = arith.addf %64, %88 : vector<8x256xf32>
    %90 = vector.extract_strided_slice %50 {offsets = [5, 0], sizes = [1, 256], strides = [1, 1]} : vector<8x256xf32> to vector<1x256xf32>
    %91 = vector.broadcast %90 : vector<1x256xf32> to vector<8x256xf32>
    %92 = arith.mulf %91, %56 : vector<8x256xf32>
    %93 = arith.addf %89, %92 : vector<8x256xf32>
    %94 = vector.extract_strided_slice %50 {offsets = [6, 0], sizes = [1, 256], strides = [1, 1]} : vector<8x256xf32> to vector<1x256xf32>
    %95 = vector.broadcast %94 : vector<1x256xf32> to vector<8x256xf32>
    %96 = arith.mulf %95, %59 : vector<8x256xf32>
    %97 = arith.addf %93, %96 : vector<8x256xf32>
    %98 = vector.extract_strided_slice %50 {offsets = [7, 0], sizes = [1, 256], strides = [1, 1]} : vector<8x256xf32> to vector<1x256xf32>
    %99 = vector.broadcast %98 : vector<1x256xf32> to vector<8x256xf32>
    %100 = arith.mulf %99, %62 : vector<8x256xf32>
    %101 = arith.addf %97, %100 : vector<8x256xf32>
    %cst_31 = arith.constant 0.000000e+00 : f32
    %102 = vector.broadcast %cst_31 : f32 to vector<8x256xf32>
    %103 = arith.maximumf %101, %102 : vector<8x256xf32>
    %c0_32 = arith.constant 0 : index
    %c8_33 = arith.constant 8 : index
    %c0_34 = arith.constant 0 : index
    %104 = vector.load %arg5[%c0_32, %c8_33, %c0_34] : memref<1x16x256xf32, #tpu.memory_space<vmem>>, vector<1x8x256xf32>
    %105 = vector.shape_cast %104 : vector<1x8x256xf32> to vector<8x256xf32>
    %106 = vector.shape_cast %103 : vector<8x256xf32> to vector<1x8x256xf32>
    tpu.vector_store %arg5[%c0_32, %c8_33, %c0_34], %106 {strides = array<i32>} : memref<1x16x256xf32, #tpu.memory_space<vmem>>, vector<1x8x256xf32>,
    return
  }
  func.func @transform_0(%arg0: i32) -> (i32, i32, i32) {
    %c0_i32 = arith.constant 0 : i32
    %c0_i32_0 = arith.constant 0 : i32
    %c0_i32_1 = arith.constant 0 : i32
    return %arg0, %c0_i32, %c0_i32_0 : i32, i32, i32
  }
  func.func @transform_1(%arg0: i32) -> (i32, i32, i32) {
    %c0_i32 = arith.constant 0 : i32
    %c0_i32_0 = arith.constant 0 : i32
    %c0_i32_1 = arith.constant 0 : i32
    %c0_i32_2 = arith.constant 0 : i32
    return %c0_i32, %c0_i32_0, %c0_i32_1 : i32, i32, i32
  }
  func.func @transform_2(%arg0: i32) -> (i32, i32, i32) {
    %c0_i32 = arith.constant 0 : i32
    %c0_i32_0 = arith.constant 0 : i32
    %c0_i32_1 = arith.constant 0 : i32
    %c0_i32_2 = arith.constant 0 : i32
    return %c0_i32, %c0_i32_0, %c0_i32_1 : i32, i32, i32
  }
  func.func @transform_3(%arg0: i32) -> (i32, i32, i32) {
    %c0_i32 = arith.constant 0 : i32
    %c0_i32_0 = arith.constant 0 : i32
    %c0_i32_1 = arith.constant 0 : i32
    %c0_i32_2 = arith.constant 0 : i32
    return %c0_i32, %c0_i32_0, %c0_i32_1 : i32, i32, i32
  }
  func.func @transform_4(%arg0: i32) -> (i32, i32, i32) {
    %c0_i32 = arith.constant 0 : i32
    %c0_i32_0 = arith.constant 0 : i32
    %c0_i32_1 = arith.constant 0 : i32
    return %arg0, %c0_i32, %c0_i32_0 : i32, i32, i32
  }
}

</mosaic_0001>

<llo_original>
// kernel: tpu_custom_call.1
$region0: #{tpu_custom_call.1}
  #allocation0 [shape = 'u32[]', space=smem, size = 0x4, offset = 0x4, fixed_abs, tag = 'smem constant byte address 0x4 - core index']
  #allocation1 [shape = 'u32[144,128]{1,0:T(1,128)}', space=vmem, size = 0x12000, scoped, tag = 'internal scratch']
  %s0 = inlined_call_operand.vmem [shape: f32[1,8,256], index: 0, kind: input, shape index: {}]
  %s1 = inlined_call_operand.hbm [shape: f32[9,8,256], index: 1, kind: input, shape index: {}]
  %s2 = inlined_call_operand.vmem [shape: f32[1,8,4], index: 2, kind: input, shape index: {}]
  %s3 = inlined_call_operand.vmem [shape: f32[1,8,1], index: 3, kind: input, shape index: {}]
  %s4 = inlined_call_operand.hbm [shape: f32[1,16,256], index: 4, kind: output, shape index: {}]
  %s5 = sld [smem:[#allocation0]]
  $region30: #{tpu_custom_call.1} parent=0
    _
  %s7 = ssub.s32 1, %s5
  %s8 = scalar_select 0, %s7, %s5
  $region1: #{tpu_custom_call.1} parent=0
    #allocation2 [shape = 'u8[73728]{0}', space=vmem, size = 0x12000, scoped, tag = 'input window, operand 1, single buffered']
    #allocation3 [shape = 's32[1]{0}', space=sflag, size = 0x4, scoped, tag = 'scoped memory for tpu_custom_call.1']
    #allocation4 [shape = 's32[1]{0}', space=sflag, size = 0x4, scoped, tag = 'scoped memory for tpu_custom_call.1']
    #allocation5 [shape = 'u8[16384]{0}', space=vmem, size = 0x4000, scoped, tag = 'output window, operand 0, single buffered']
    %9 = vsyncpa [#allocation3], 0
    %10 = vsyncpa [#allocation4], 0
    // Predicated region
    $region2: #{tpu_custom_call.1} parent=1 // pred_check
      _
    $region3: #{tpu_custom_call.1} parent=1 // pred_check_branch
      %12 = sbr.rel (0) target = $region5
    $region4: #{tpu_custom_call.1} parent=1 // pred_region
      _
    $region5: #{tpu_custom_call.1} parent=1 // pred_fallthru
      _
    // Predicated region
    $region6: #{tpu_custom_call.1} parent=1 // pred_check
      _
    $region7: #{tpu_custom_call.1} parent=1 // pred_check_branch
      %14 = sbr.rel (0) target = $region9
    $region8: #{tpu_custom_call.1} parent=1 // pred_region
      %s16 = ssub.s32 2304, 2304
      %17 = vsyncadd [#allocation3], %s16
      %s18 = sshll.u32 [#allocation2], 4
      %s19 = int_to_ptr.vmem [resolvable:$true] %s18
      %24 = dma.hbm_to_vmem [thread:$0]  %s1, 2304, %s19, [#allocation3], 256, 256, 16
    $region9: #{tpu_custom_call.1} parent=1 // pred_fallthru
      _
    // Predicated region
    $region10: #{tpu_custom_call.1} parent=1 // pred_check
      _
    $region11: #{tpu_custom_call.1} parent=1 // pred_check_branch
      %26 = sbr.rel (0) target = $region13
    $region12: #{tpu_custom_call.1} parent=1 // pred_region
      _
    $region13: #{tpu_custom_call.1} parent=1 // pred_fallthru
      _
    // Predicated region
    $region14: #{tpu_custom_call.1} parent=1 // pred_check
      _
    $region15: #{tpu_custom_call.1} parent=1 // pred_check_branch
      %28 = sbr.rel (0) target = $region17
    $region16: #{tpu_custom_call.1} parent=1 // pred_region
      _
    $region17: #{tpu_custom_call.1} parent=1 // pred_fallthru
      _
    // Predicated region
    $region18: #{tpu_custom_call.1} parent=1 // pred_check
      _
    $region19: #{tpu_custom_call.1} parent=1 // pred_check_branch
      %30 = sbr.rel (0) target = $region21
    $region20: #{tpu_custom_call.1} parent=1 // pred_region
      %31 = dma.done [#allocation3], 2304
    $region21: #{tpu_custom_call.1} parent=1 // pred_fallthru
      _
    %v32 = vld [vmem:[%s0] sm:$0xff]
    %v33 = vld [vmem:[%s0 + $0x8] sm:$0xff]
    %v34 = vld [vmem:[%s2] sm:$0xff]
    %v35 = vld [vmem:[%s3] sm:$0xff]
    %36 = vrot.lane.b32.xlu0 %v32, 17
    %v37 = vpop.permute.xlu0 %36
    %38 = vrot.lane.b32.xlu0 %v33, 17
    %v39 = vpop.permute.xlu0 %38
    %v40 = vlaneseq
    %v41 = vand.u32 %v40, 127
    %vm42 = vcmp.lt.s32.totalorder %v41, 17
    %v43 = vsel %vm42, %v37, %v39
    %v44 = vsel %vm42, %v39, %v37
    %v45 = vld [vmem:[#allocation2] sm:$0xff]
    %v46 = vld [vmem:[#allocation2 + $0x8] sm:$0xff]
    %v47 = vmul.f32 %v44, %v45
    %v48 = vmul.f32 %v43, %v46
    %v49 = vadd.f32 %v47, 0.0
    %v50 = vadd.f32 %v48, 0.0
    %51 = vrot.lane.b32.xlu0 %v32, 16
    %v52 = vpop.permute.xlu0 %51
    %53 = vrot.lane.b32.xlu0 %v33, 16
    %v54 = vpop.permute.xlu0 %53
    %vm55 = vcmp.lt.s32.totalorder %v41, 16
    %v56 = vsel %vm55, %v52, %v54
    %v57 = vsel %vm55, %v54, %v52
    %s58 = scalar_lea.vmem [#allocation2], 16
    %v59 = vld [vmem:[%s58] sm:$0xff]
    %v60 = vld [vmem:[%s58 + $0x8] sm:$0xff]
    %v61 = vmul.f32 %v57, %v59
    %v62 = vmul.f32 %v56, %v60
    %v63 = vadd.f32 %v49, %v61
    %v64 = vadd.f32 %v50, %v62
    %65 = vrot.lane.b32.xlu0 %v32, 15
    %v66 = vpop.permute.xlu0 %65
    %67 = vrot.lane.b32.xlu0 %v33, 15
    %v68 = vpop.permute.xlu0 %67
    %vm69 = vcmp.lt.s32.totalorder %v41, 15
    %v70 = vsel %vm69, %v66, %v68
    %v71 = vsel %vm69, %v68, %v66
    %s72 = scalar_lea.vmem [#allocation2], 32
    %v73 = vld [vmem:[%s72] sm:$0xff]
    %v74 = vld [vmem:[%s72 + $0x8] sm:$0xff]
    %v75 = vmul.f32 %v71, %v73
    %v76 = vmul.f32 %v70, %v74
    %v77 = vadd.f32 %v63, %v75
    %v78 = vadd.f32 %v64, %v76
    %79 = vrot.lane.b32.xlu0 %v32, 1
    %v80 = vpop.permute.xlu0 %79
    %81 = vrot.lane.b32.xlu0 %v33, 1
    %v82 = vpop.permute.xlu0 %81
    %vm83 = vcmp.lt.s32.totalorder %v41, 1
    %v84 = vsel %vm83, %v80, %v82
    %v85 = vsel %vm83, %v82, %v80
    %s86 = scalar_lea.vmem [#allocation2], 48
    %v87 = vld [vmem:[%s86] sm:$0xff]
    %v88 = vld [vmem:[%s86 + $0x8] sm:$0xff]
    %v89 = vmul.f32 %v85, %v87
    %v90 = vmul.f32 %v84, %v88
    %v91 = vadd.f32 %v77, %v89
    %v92 = vadd.f32 %v78, %v90
    %s93 = scalar_lea.vmem [#allocation2], 64
    %v94 = vld [vmem:[%s93] sm:$0xff]
    %v95 = vld [vmem:[%s93 + $0x8] sm:$0xff]
    %v96 = vmul.f32 %v32, %v94
    %v97 = vmul.f32 %v33, %v95
    %v98 = vadd.f32 %v91, %v96
    %v99 = vadd.f32 %v92, %v97
    %100 = vrot.lane.b32.xlu0 %v32, 127
    %v101 = vpop.permute.xlu0 %100
    %102 = vrot.lane.b32.xlu0 %v33, 127
    %v103 = vpop.permute.xlu0 %102
    %vm104 = vcmp.lt.s32.totalorder %v41, 127
    %v105 = vsel %vm104, %v101, %v103
    %v106 = vsel %vm104, %v103, %v101
    %s107 = scalar_lea.vmem [#allocation2], 80
    %v108 = vld [vmem:[%s107] sm:$0xff]
    %v109 = vld [vmem:[%s107 + $0x8] sm:$0xff]
    %v110 = vmul.f32 %v105, %v108
    %v111 = vmul.f32 %v106, %v109
    %v112 = vadd.f32 %v98, %v110
    %v113 = vadd.f32 %v99, %v111
    %114 = vrot.lane.b32.xlu0 %v32, 113
    %v115 = vpop.permute.xlu0 %114
    %116 = vrot.lane.b32.xlu0 %v33, 113
    %v117 = vpop.permute.xlu0 %116
    %vm118 = vcmp.lt.s32.totalorder %v41, 113
    %v119 = vsel %vm118, %v115, %v117
    %v120 = vsel %vm118, %v117, %v115
    %s121 = scalar_lea.vmem [#allocation2], 96
    %v122 = vld [vmem:[%s121] sm:$0xff]
    %v123 = vld [vmem:[%s121 + $0x8] sm:$0xff]
    %v124 = vmul.f32 %v119, %v122
    %v125 = vmul.f32 %v120, %v123
    %v126 = vadd.f32 %v112, %v124
    %v127 = vadd.f32 %v113, %v125
    %128 = vrot.lane.b32.xlu0 %v32, 112
    %v129 = vpop.permute.xlu0 %128
    %130 = vrot.lane.b32.xlu0 %v33, 112
    %v131 = vpop.permute.xlu0 %130
    %vm132 = vcmp.lt.s32.totalorder %v41, 112
    %v133 = vsel %vm132, %v129, %v131
    %v134 = vsel %vm132, %v131, %v129
    %s135 = scalar_lea.vmem [#allocation2], 112
    %v136 = vld [vmem:[%s135] sm:$0xff]
    %v137 = vld [vmem:[%s135 + $0x8] sm:$0xff]
    %v138 = vmul.f32 %v133, %v136
    %v139 = vmul.f32 %v134, %v137
    %v140 = vadd.f32 %v126, %v138
    %v141 = vadd.f32 %v127, %v139
    %142 = vrot.lane.b32.xlu0 %v32, 111
    %v143 = vpop.permute.xlu0 %142
    %144 = vrot.lane.b32.xlu0 %v33, 111
    %v145 = vpop.permute.xlu0 %144
    %vm146 = vcmp.lt.s32.totalorder %v41, 111
    %v147 = vsel %vm146, %v143, %v145
    %v148 = vsel %vm146, %v145, %v143
    %s149 = scalar_lea.vmem [#allocation2], 128
    %v150 = vld [vmem:[%s149] sm:$0xff]
    %v151 = vld [vmem:[%s149 + $0x8] sm:$0xff]
    %v152 = vmul.f32 %v147, %v150
    %v153 = vmul.f32 %v148, %v151
    %v154 = vadd.f32 %v140, %v152
    %v155 = vadd.f32 %v141, %v153
    %157 = vset.pattern.permute.xlu0 0
    %158 = vperm.xlu0 %157, %v34
    %v159 = vpop.permute.xlu0 %158
    %161 = vset.pattern.permute.xlu0 1
    %162 = vperm.xlu0 %161, %v34
    %v163 = vpop.permute.xlu0 %162
    %165 = vset.pattern.permute.xlu0 2
    %166 = vperm.xlu0 %165, %v34
    %v167 = vpop.permute.xlu0 %166
    %169 = vset.pattern.permute.xlu0 3
    %170 = vperm.xlu0 %169, %v34
    %v171 = vpop.permute.xlu0 %170
    %174 = vset.pattern.permute.xlu0 0
    %175 = vperm.xlu0 %174, %v35
    %v176 = vpop.permute.xlu0 %175
    %v178 = vlaneseq
    %v179 = vshrl.u32 %v178, 7
    %v180 = vsub.s32 0, %v179
    %v181 = vrot.slane %v154, %v180
    %v182 = vlaneseq
    %v183 = vshrl.u32 %v182, 7
    %v184 = vsub.s32 0, %v183
    %v185 = vrot.slane %v155, %v184
    %v186 = vmul.f32 %v181, %v159
    %v187 = vmul.f32 %v185, %v159
    %v188 = vadd.f32 %v176, %v186
    %v189 = vadd.f32 %v176, %v187
    %v190 = vlaneseq
    %v191 = vshrl.u32 %v190, 7
    %v192 = vsub.s32 1, %v191
    %v193 = vrot.slane %v154, %v192
    %v194 = vlaneseq
    %v195 = vshrl.u32 %v194, 7
    %v196 = vsub.s32 1, %v195
    %v197 = vrot.slane %v155, %v196
    %v198 = vmul.f32 %v193, %v163
    %v199 = vmul.f32 %v197, %v163
    %v200 = vadd.f32 %v188, %v198
    %v201 = vadd.f32 %v189, %v199
    %v202 = vlaneseq
    %v203 = vshrl.u32 %v202, 7
    %v204 = vsub.s32 2, %v203
    %v205 = vrot.slane %v154, %v204
    %v206 = vlaneseq
    %v207 = vshrl.u32 %v206, 7
    %v208 = vsub.s32 2, %v207
    %v209 = vrot.slane %v155, %v208
    %v210 = vmul.f32 %v205, %v167
    %v211 = vmul.f32 %v209, %v167
    %v212 = vadd.f32 %v200, %v210
    %v213 = vadd.f32 %v201, %v211
    %v214 = vlaneseq
    %v215 = vshrl.u32 %v214, 7
    %v216 = vsub.s32 3, %v215
    %v217 = vrot.slane %v154, %v216
    %v218 = vlaneseq
    %v219 = vshrl.u32 %v218, 7
    %v220 = vsub.s32 3, %v219
    %v221 = vrot.slane %v155, %v220
    %v222 = vmul.f32 %v217, %v171
    %v223 = vmul.f32 %v221, %v171
    %v224 = vadd.f32 %v212, %v222
    %v225 = vadd.f32 %v213, %v223
    %v226 = vmax.f32 %v224, 0.0
    %v227 = vmax.f32 %v225, 0.0
    %228 = vst [vmem:[#allocation5] sm:$0xff] %v226
    %229 = vst [vmem:[#allocation5 + $0x8] sm:$0xff] %v227
    %v230 = vlaneseq
    %v231 = vshrl.u32 %v230, 7
    %v232 = vsub.s32 4, %v231
    %v233 = vrot.slane %v154, %v232
    %v234 = vlaneseq
    %v235 = vshrl.u32 %v234, 7
    %v236 = vsub.s32 4, %v235
    %v237 = vrot.slane %v155, %v236
    %v238 = vmul.f32 %v233, %v159
    %v239 = vmul.f32 %v237, %v159
    %v240 = vadd.f32 %v176, %v238
    %v241 = vadd.f32 %v176, %v239
    %v242 = vlaneseq
    %v243 = vshrl.u32 %v242, 7
    %v244 = vsub.s32 5, %v243
    %v245 = vrot.slane %v154, %v244
    %v246 = vlaneseq
    %v247 = vshrl.u32 %v246, 7
    %v248 = vsub.s32 5, %v247
    %v249 = vrot.slane %v155, %v248
    %v250 = vmul.f32 %v245, %v163
    %v251 = vmul.f32 %v249, %v163
    %v252 = vadd.f32 %v240, %v250
    %v253 = vadd.f32 %v241, %v251
    %v254 = vlaneseq
    %v255 = vshrl.u32 %v254, 7
    %v256 = vsub.s32 6, %v255
    %v257 = vrot.slane %v154, %v256
    %v258 = vlaneseq
    %v259 = vshrl.u32 %v258, 7
    %v260 = vsub.s32 6, %v259
    %v261 = vrot.slane %v155, %v260
    %v262 = vmul.f32 %v257, %v167
    %v263 = vmul.f32 %v261, %v167
    %v264 = vadd.f32 %v252, %v262
    %v265 = vadd.f32 %v253, %v263
    %v266 = vlaneseq
    %v267 = vshrl.u32 %v266, 7
    %v268 = vsub.s32 7, %v267
    %v269 = vrot.slane %v154, %v268
    %v270 = vlaneseq
    %v271 = vshrl.u32 %v270, 7
    %v272 = vsub.s32 7, %v271
    %v273 = vrot.slane %v155, %v272
    %v274 = vmul.f32 %v269, %v171
    %v275 = vmul.f32 %v273, %v171
    %v276 = vadd.f32 %v264, %v274
    %v277 = vadd.f32 %v265, %v275
    %v278 = vmax.f32 %v276, 0.0
    %v279 = vmax.f32 %v277, 0.0
    %280 = vst [vmem:[#allocation5 + $0x10] sm:$0xff] %v278
    %281 = vst [vmem:[#allocation5 + $0x18] sm:$0xff] %v279
    // Predicated region
    $region22: #{tpu_custom_call.1} parent=1 // pred_check
      _
    $region23: #{tpu_custom_call.1} parent=1 // pred_check_branch
      %283 = sbr.rel (0) target = $region25
    $region24: #{tpu_custom_call.1} parent=1 // pred_region
      %s285 = ssub.s32 512, 512
      %286 = vsyncadd [#allocation4], %s285
      %s287 = sshll.u32 [#allocation5], 4
      %s288 = int_to_ptr.vmem [resolvable:$true] %s287
      %293 = dma.vmem_to_hbm [thread:$0]  %s288, 512, %s4, [#allocation4], 256, 256, 16
    $region25: #{tpu_custom_call.1} parent=1 // pred_fallthru
      _
    // Predicated region
    $region26: #{tpu_custom_call.1} parent=1 // pred_check
      _
    $region27: #{tpu_custom_call.1} parent=1 // pred_check_branch
      %295 = sbr.rel (0) target = $region29
    $region28: #{tpu_custom_call.1} parent=1 // pred_region
      %296 = dma.done [#allocation4], 512
    $region29: #{tpu_custom_call.1} parent=1 // pred_fallthru
      _
    %297 = vsyncpa [#allocation3], 1
    %298 = vsyncpa [#allocation4], 1

</llo_original>
